<compile_context>
chip_gen: v6e
topology: v6e:2x2x1
jax: 0.10.0
libtpu: 0.0.40
codegen_flags: <defaults>
</compile_context>

<pallas_src>
import jax
import jax.numpy as jnp
from jax.experimental import pallas as pl
from jax.experimental.pallas import tpu as pltpu

_LANES = 128
_SUBLANES = 8
_NUM_SHARDS = 2            # use both TensorCores on v7x; harmless on v5e/v6e
_DEFAULT_TILE_ROWS = 1024  # (1024, 128) f32 tile = 512 KiB per input buffer


def _round_up(x: int, m: int) -> int:
    return ((x + m - 1) // m) * m


def _make_mse_kernel(n_rows, tile_rows, blocks_per_shard, inv_n, needs_mask):
    def kernel(p_ref, t_ref, o_ref, acc_ref):
        c = pl.program_id(0)   # shard (TensorCore) axis -- parallel
        i = pl.program_id(1)   # row-block axis -- reduction (arbitrary)

        @pl.when(i == 0)
        def _():
            acc_ref[...] = jnp.zeros_like(acc_ref)

        # Cast in-kernel so bf16 inputs travel through HBM at half the bytes.
        d = p_ref[...].astype(jnp.float32) - t_ref[...].astype(jnp.float32)
        sq = d * d

        if needs_mask:
            # Zero out rows past the true row count (partial last block and any
            # redundant clamped shard block).
            row_start = (c * blocks_per_shard + i) * tile_rows
            row_idx = row_start + jax.lax.broadcasted_iota(
                jnp.int32, (tile_rows, 1), 0)
            sq = jnp.where(row_idx < n_rows, sq, 0.0)

        # Vreg-shaped partial sums: only elementwise VPU adds in the hot loop.
        acc_ref[...] += sq.reshape(
            tile_rows // _SUBLANES, _SUBLANES, _LANES).sum(axis=0)

        # Single cross-lane reduce + 1/N scale on the final reduction step.
        @pl.when(i == pl.num_programs(1) - 1)
        def _():
            o_ref[...] = (jnp.sum(acc_ref[...]) * inv_n).reshape(1, 1)

    return kernel


def ls_mse_loss(predictions: jax.Array, targets: jax.Array,
                *, tile_rows: int = _DEFAULT_TILE_ROWS) -> jax.Array:
    """Pallas TPU implementation of torch.mean((predictions - targets) ** 2)."""
    assert predictions.shape == targets.shape
    n_elem = predictions.size
    out_dtype = jnp.result_type(predictions.dtype, targets.dtype)

    # Keep inputs in their native dtype (bf16 stays bf16); cast happens in-kernel.
    p = predictions.reshape(-1)
    t = targets.reshape(-1)

    # Lane alignment only: pad by at most 127 zeros when n_elem % 128 != 0
    # (zeros contribute nothing to the sum of squared differences).  No
    # tile-level padding is ever performed -- the kernel masks partial blocks.
    n_lane = _round_up(n_elem, _LANES)
    if n_lane != n_elem:
        p = jnp.pad(p, (0, n_lane - n_elem))
        t = jnp.pad(t, (0, n_lane - n_elem))
    rows = n_lane // _LANES

    # Clamp the tile to the problem size so small inputs do not allocate
    # oversized VMEM blocks; keep the tile a multiple of 8 sublanes and never
    # larger than the array (partial last block is handled by the mask).
    if rows >= _SUBLANES:
        tile_rows = min(int(tile_rows), (rows // _SUBLANES) * _SUBLANES)
    else:
        tile_rows = _SUBLANES
    tile_rows = max(_SUBLANES, _round_up(tile_rows, _SUBLANES))

    p2 = p.reshape(rows, _LANES)
    t2 = t.reshape(rows, _LANES)

    total_blocks = pl.cdiv(rows, tile_rows)
    num_shards = min(_NUM_SHARDS, total_blocks)
    blocks_per_shard = pl.cdiv(total_blocks, num_shards)
    # Mask whenever the logical (shards x blocks x tile) grid overshoots rows.
    needs_mask = (num_shards * blocks_per_shard * tile_rows) != rows

    inv_n = 1.0 / float(n_elem)
    last_block = total_blocks - 1

    def in_map(c, i):
        # Clamp so a fully out-of-range shard block re-reads the last valid
        # block instead of DMA-ing out of bounds; its contribution is masked
        # to zero inside the kernel.
        return (jnp.minimum(c * blocks_per_shard + i, last_block), 0)

    # VMEM budget: 2 inputs x 2 pipeline buffers each (+ tiny scratch/output).
    itemsize = max(jnp.dtype(predictions.dtype).itemsize,
                   jnp.dtype(targets.dtype).itemsize)
    pipeline_bytes = 2 * 2 * tile_rows * _LANES * itemsize
    compiler_kwargs = dict(dimension_semantics=("parallel", "arbitrary"))
    if pipeline_bytes > 8 * 1024 * 1024:
        # Raise the scoped-VMEM limit (v5e default is 16 MiB) while staying
        # well under v7x's 64 MiB physical VMEM.
        compiler_kwargs["vmem_limit_bytes"] = min(
            2 * pipeline_bytes, 48 * 1024 * 1024)

    partials = pl.pallas_call(
        _make_mse_kernel(rows, tile_rows, blocks_per_shard, inv_n, needs_mask),
        out_shape=jax.ShapeDtypeStruct((num_shards, 1), jnp.float32),
        grid_spec=pltpu.PrefetchScalarGridSpec(
            num_scalar_prefetch=0,
            grid=(num_shards, blocks_per_shard),
            in_specs=[
                pl.BlockSpec((tile_rows, _LANES), in_map),
                pl.BlockSpec((tile_rows, _LANES), in_map),
            ],
            out_specs=pl.BlockSpec((1, 1), lambda c, i: (c, 0)),
            scratch_shapes=[pltpu.VMEM((_SUBLANES, _LANES), jnp.float32)],
        ),
        compiler_params=pltpu.CompilerParams(**compiler_kwargs),
    )(p2, t2)

    # Each shard already applied the 1/N scale; summing partials gives the mean.
    return jnp.sum(partials).astype(out_dtype)


class LossData:
    loss_epe: float
    loss_warp: float
    loss_gan: float


def ls_loss_function(predictions: jax.Array, targets: jax.Array):
    """Mirrors LSLossFunction.forward: returns (loss, LossData with loss_gan)."""
    loss = ls_mse_loss(predictions, targets)
    loss_data = LossData()
    # Keep the device scalar; convert with float() only at logging time so a
    # training loop is not serialized by a blocking device->host transfer.
    loss_data.loss_gan = loss
    return loss, loss_data


if __name__ == "__main__":
    key = jax.random.PRNGKey(0)
    k1, k2 = jax.random.split(key)

    # Small NCHW tensors consistent with a flow/GAN prediction head.
    shape = (2, 4, 16, 16)
    predictions = jax.random.normal(k1, shape, dtype=jnp.float32)
    targets = jax.random.normal(k2, shape, dtype=jnp.float32)

    loss, loss_data = ls_loss_function(predictions, targets)
    loss = jax.block_until_ready(loss)

    ref = jnp.mean((predictions - targets) ** 2)
    assert jnp.allclose(loss, ref, rtol=1e-6, atol=1e-6), (loss, ref)

    # Non-tile-aligned case exercising the in-kernel masking + 2-shard path.
    shape2 = (3, 5, 9, 11)  # 1485 elems -> 12 rows of 128 with a padded tail
    p2 = jax.random.normal(k1, shape2, dtype=jnp.float32)
    t2 = jax.random.normal(k2, shape2, dtype=jnp.float32)
    loss2 = jax.block_until_ready(ls_mse_loss(p2, t2))
    ref2 = jnp.mean((p2 - t2) ** 2)
    assert jnp.allclose(loss2, ref2, rtol=1e-6, atol=1e-6), (loss2, ref2)

    # Host transfer happens only here ("logging time").
    assert isinstance(float(loss_data.loss_gan), float)

    print("KERNEL_OK")
</pallas_src>

<mosaic_0001>
module attributes {stable_mosaic.version = 11 : i64} {
  func.func @kernel(%arg0: i32, %arg1: i32, %arg2: memref<16x128xf32, #tpu.memory_space<vmem>>, %arg3: memref<16x128xf32, #tpu.memory_space<vmem>>, %arg4: memref<1x1xf32, #tpu.memory_space<vmem>>, %arg5: memref<8x128xf32, #tpu.memory_space<vmem>>) attributes {dimension_semantics = [#tpu.dimension_semantics<parallel>, #tpu.dimension_semantics<arbitrary>], iteration_bounds = array<i64: 1, 1>, scalar_prefetch = 0 : i64, scratch_operands = 1 : i64, tpu.core_type = #tpu.core_type<tc>, window_params = [{transform_indices = @transform_0, window_bounds = array<i64: 16, 128>}, {transform_indices = @transform_1, window_bounds = array<i64: 16, 128>}, {transform_indices = @transform_2, window_bounds = array<i64: 1, 1>}]} {
    %c0_i32 = arith.constant 0 : i32
    %0 = arith.cmpi eq, %arg1, %c0_i32 : i32
    %1 = arith.extui %0 : i1 to i32
    %c0_i32_0 = arith.constant 0 : i32
    %2 = arith.cmpi ne, %1, %c0_i32_0 : i32
    scf.if %2 {
      %cst_10 = arith.constant 0.000000e+00 : f32
      %15 = vector.broadcast %cst_10 : f32 to vector<8x128xf32>
      %c0_11 = arith.constant 0 : index
      %c0_12 = arith.constant 0 : index
      %16 = vector.load %arg5[%c0_11, %c0_12] : memref<8x128xf32, #tpu.memory_space<vmem>>, vector<8x128xf32>
      tpu.vector_store %arg5[%c0_11, %c0_12], %15 {strides = array<i32>} : memref<8x128xf32, #tpu.memory_space<vmem>>, vector<8x128xf32>,
    } else {
    }
    %c0 = arith.constant 0 : index
    %c0_1 = arith.constant 0 : index
    %3 = vector.load %arg2[%c0, %c0_1] : memref<16x128xf32, #tpu.memory_space<vmem>>, vector<16x128xf32>
    %c0_2 = arith.constant 0 : index
    %c0_3 = arith.constant 0 : index
    %4 = vector.load %arg3[%c0_2, %c0_3] : memref<16x128xf32, #tpu.memory_space<vmem>>, vector<16x128xf32>
    %5 = arith.subf %3, %4 : vector<16x128xf32>
    %6 = arith.mulf %5, %5 : vector<16x128xf32>
    %c0_4 = arith.constant 0 : index
    %c0_5 = arith.constant 0 : index
    %7 = vector.load %arg5[%c0_4, %c0_5] : memref<8x128xf32, #tpu.memory_space<vmem>>, vector<8x128xf32>
    %8 = vector.shape_cast %6 : vector<16x128xf32> to vector<2x8x128xf32>
    %cst = arith.constant dense<0.000000e+00> : vector<8x128xf32>
    %9 = vector.multi_reduction <add>, %8, %cst [0] : vector<2x8x128xf32> to vector<8x128xf32>
    %10 = arith.addf %7, %9 : vector<8x128xf32>
    %c0_6 = arith.constant 0 : index
    %c0_7 = arith.constant 0 : index
    %11 = vector.load %arg5[%c0_6, %c0_7] : memref<8x128xf32, #tpu.memory_space<vmem>>, vector<8x128xf32>
    tpu.vector_store %arg5[%c0_6, %c0_7], %10 {strides = array<i32>} : memref<8x128xf32, #tpu.memory_space<vmem>>, vector<8x128xf32>,
    %c0_i32_8 = arith.constant 0 : i32
    %12 = arith.cmpi eq, %arg1, %c0_i32_8 : i32
    %13 = arith.extui %12 : i1 to i32
    %c0_i32_9 = arith.constant 0 : i32
    %14 = arith.cmpi ne, %13, %c0_i32_9 : i32
    scf.if %14 {
      %c0_10 = arith.constant 0 : index
      %c0_11 = arith.constant 0 : index
      %15 = vector.load %arg5[%c0_10, %c0_11] : memref<8x128xf32, #tpu.memory_space<vmem>>, vector<8x128xf32>
      %16 = vector.shape_cast %15 : vector<8x128xf32> to vector<1x8x128xf32>
      %cst_12 = arith.constant dense<0.000000e+00> : vector<1xf32>
      %17 = vector.multi_reduction <add>, %16, %cst_12 [1, 2] : vector<1x8x128xf32> to vector<1xf32>
      %18 = vector.shape_cast %17 : vector<1xf32> to vector<1x1x1xf32>
      %19 = vector.extract %18[0, 0, 0] : f32 from vector<1x1x1xf32>
      %cst_13 = arith.constant 4.8828125E-4 : f32
      %20 = arith.mulf %19, %cst_13 : f32
      %21 = vector.broadcast %20 : f32 to vector<1x1xf32>
      %c0_14 = arith.constant 0 : index
      %c0_15 = arith.constant 0 : index
      %22 = vector.load %arg4[%c0_14, %c0_15] : memref<1x1xf32, #tpu.memory_space<vmem>>, vector<1x1xf32>
      tpu.vector_store %arg4[%c0_14, %c0_15], %21 {strides = array<i32>} : memref<1x1xf32, #tpu.memory_space<vmem>>, vector<1x1xf32>,
    } else {
    }
    return
  }
  func.func @transform_0(%arg0: i32, %arg1: i32) -> (i32, i32) {
    %c1_i32 = arith.constant 1 : i32
    %0 = arith.muli %arg0, %c1_i32 : i32
    %1 = arith.addi %0, %arg1 : i32
    %c0_i32 = arith.constant 0 : i32
    %2 = arith.minsi %1, %c0_i32 : i32
    %c0_i32_0 = arith.constant 0 : i32
    %c0_i32_1 = arith.constant 0 : i32
    return %2, %c0_i32_0 : i32, i32
  }
  func.func @transform_1(%arg0: i32, %arg1: i32) -> (i32, i32) {
    %c1_i32 = arith.constant 1 : i32
    %0 = arith.muli %arg0, %c1_i32 : i32
    %1 = arith.addi %0, %arg1 : i32
    %c0_i32 = arith.constant 0 : i32
    %2 = arith.minsi %1, %c0_i32 : i32
    %c0_i32_0 = arith.constant 0 : i32
    %c0_i32_1 = arith.constant 0 : i32
    return %2, %c0_i32_0 : i32, i32
  }
  func.func @transform_2(%arg0: i32, %arg1: i32) -> (i32, i32) {
    %c0_i32 = arith.constant 0 : i32
    %c0_i32_0 = arith.constant 0 : i32
    return %arg0, %c0_i32 : i32, i32
  }
}

</mosaic_0001>

<llo_original>
// kernel: tpu_custom_call.1
$region0: #{tpu_custom_call.1}
  #allocation0 [shape = 'u32[]', space=smem, size = 0x4, offset = 0x4, fixed_abs, tag = 'smem constant byte address 0x4 - core index']
  #allocation1 [shape = 'u32[144,128]{1,0:T(1,128)}', space=vmem, size = 0x12000, scoped, tag = 'internal scratch']
  #allocation2 [shape = 'f32[8,128]{1,0:T(8,128)}', space=vmem, size = 0x1000, scoped, tag = 'scratch operand']
  %s0 = inlined_call_operand.hbm [shape: f32[16,128], index: 0, kind: input, shape index: {}]
  %s1 = inlined_call_operand.hbm [shape: f32[16,128], index: 1, kind: input, shape index: {}]
  %s2 = inlined_call_operand.hbm [shape: f32[1,1], index: 2, kind: output, shape index: {}]
  %s3 = sld [smem:[#allocation0]]
  $region34: #{tpu_custom_call.1} parent=0
    _
  %s5 = ssub.s32 1, %s3
  %s6 = scalar_select 0, %s5, %s3
  $region1: #{tpu_custom_call.1} parent=0
    #allocation3 [shape = 'u8[8192]{0}', space=vmem, size = 0x2000, scoped, tag = 'input window, operand 0, single buffered']
    #allocation4 [shape = 's32[1]{0}', space=sflag, size = 0x4, scoped, tag = 'scoped memory for tpu_custom_call.1']
    #allocation5 [shape = 's32[1]{0}', space=sflag, size = 0x4, scoped, tag = 'scoped memory for tpu_custom_call.1']
    #allocation6 [shape = 'u8[8192]{0}', space=vmem, size = 0x2000, scoped, tag = 'input window, operand 1, single buffered']
    #allocation7 [shape = 's32[1]{0}', space=sflag, size = 0x4, scoped, tag = 'scoped memory for tpu_custom_call.1']
    #allocation8 [shape = 'u8[512]{0}', space=vmem, size = 0x400, scoped, tag = 'output window, operand 0, single buffered']
    %7 = vsyncpa [#allocation4], 0
    %8 = vsyncpa [#allocation7], 0
    %9 = vsyncpa [#allocation5], 0
    // Predicated region
    $region2: #{tpu_custom_call.1} parent=1 // pred_check
      _
    $region3: #{tpu_custom_call.1} parent=1 // pred_check_branch
      %11 = sbr.rel (0) target = $region5
    $region4: #{tpu_custom_call.1} parent=1 // pred_region
      %s12 = sadd.s32 0, 0
      %p13 = scmp.lt.s32.totalorder %s12, 0
      %s14 = scalar_select %p13, %s12, 0
      %s15 = smul.u32 2, %s14
      %s17 = ssub.s32 256, 256
      %18 = vsyncadd [#allocation4], %s17
      %s19 = smul.addr %s15, 128
      %s20 = scalar_lea.hbm %s0, %s19
      %s21 = sshll.u32 [#allocation3], 4
      %s22 = int_to_ptr.vmem [resolvable:$true] %s21
      %27 = dma.hbm_to_vmem [thread:$0]  %s20, 256, %s22, [#allocation4], 128, 128, 8
    $region5: #{tpu_custom_call.1} parent=1 // pred_fallthru
      _
    // Predicated region
    $region6: #{tpu_custom_call.1} parent=1 // pred_check
      _
    $region7: #{tpu_custom_call.1} parent=1 // pred_check_branch
      %29 = sbr.rel (0) target = $region9
    $region8: #{tpu_custom_call.1} parent=1 // pred_region
      %s30 = sadd.s32 0, 0
      %p31 = scmp.lt.s32.totalorder %s30, 0
      %s32 = scalar_select %p31, %s30, 0
      %s33 = smul.u32 2, %s32
      %s35 = ssub.s32 256, 256
      %36 = vsyncadd [#allocation7], %s35
      %s37 = smul.addr %s33, 128
      %s38 = scalar_lea.hbm %s1, %s37
      %s39 = sshll.u32 [#allocation6], 4
      %s40 = int_to_ptr.vmem [resolvable:$true] %s39
      %45 = dma.hbm_to_vmem [thread:$0]  %s38, 256, %s40, [#allocation7], 128, 128, 8
    $region9: #{tpu_custom_call.1} parent=1 // pred_fallthru
      _
    // Predicated region
    $region10: #{tpu_custom_call.1} parent=1 // pred_check
      _
    $region11: #{tpu_custom_call.1} parent=1 // pred_check_branch
      %47 = sbr.rel (0) target = $region13
    $region12: #{tpu_custom_call.1} parent=1 // pred_region
      %48 = dma.done [#allocation4], 256
    $region13: #{tpu_custom_call.1} parent=1 // pred_fallthru
      _
    // Predicated region
    $region14: #{tpu_custom_call.1} parent=1 // pred_check
      _
    $region15: #{tpu_custom_call.1} parent=1 // pred_check_branch
      %50 = sbr.rel (0) target = $region17
    $region16: #{tpu_custom_call.1} parent=1 // pred_region
      %51 = dma.done [#allocation7], 256
    $region17: #{tpu_custom_call.1} parent=1 // pred_fallthru
      _
    %s52 = sadd.s32 0, 0
    %p53 = scmp.lt.s32.totalorder %s52, 0
    %s54 = scalar_select %p53, %s52, 0
    %s55 = smul.u32 2, %s54
    %s56 = sadd.s32 0, 0
    %p57 = scmp.lt.s32.totalorder %s56, 0
    %s58 = scalar_select %p57, %s56, 0
    %s59 = smul.u32 2, %s58
    %p60 = scmp.eq.s32.totalorder 0, 0
    // Predicated region
    $region18: #{tpu_custom_call.1} parent=1 // pred_check
      %p61 = pneg %p60
    $region19: #{tpu_custom_call.1} parent=1 // pred_check_branch
      %63 = sbr.rel (%p61) target = $region21
    $region20: #{tpu_custom_call.1} parent=1 // pred_region
      %64 = vst [vmem:[#allocation2] sm:$0xff] 0.0
    $region21: #{tpu_custom_call.1} parent=1 // pred_fallthru
      _
    %v65 = vld [vmem:[#allocation3] sm:$0xff]
    %v66 = vld [vmem:[#allocation3 + $0x8] sm:$0xff]
    %v67 = vld [vmem:[#allocation6] sm:$0xff]
    %v68 = vld [vmem:[#allocation6 + $0x8] sm:$0xff]
    %v69 = vsub.f32 %v65, %v67
    %v70 = vsub.f32 %v66, %v68
    %v71 = vmul.f32 %v69, %v69
    %v72 = vmul.f32 %v70, %v70
    %v73 = vld [vmem:[#allocation2] sm:$0xff]
    %v74 = vadd.f32 %v71, %v72
    %v75 = vadd.f32 %v73, %v74
    %76 = vst [vmem:[#allocation2] sm:$0xff] %v75
    // Predicated region
    $region22: #{tpu_custom_call.1} parent=1 // pred_check
      %p77 = pneg %p60
    $region23: #{tpu_custom_call.1} parent=1 // pred_check_branch
      %79 = sbr.rel (%p77) target = $region25
    $region24: #{tpu_custom_call.1} parent=1 // pred_region
      %v80 = vld [vmem:[#allocation2] sm:$0xff]
      %81 = vadd.xlane.f32.xlu0 %v80
      %v82 = vpop.xlane.xlu0 %81
      %v83 = vrot.slane %v82, 4
      %v84 = vadd.f32 %v82, %v83
      %v85 = vrot.slane %v84, 2
      %v86 = vadd.f32 %v84, %v85
      %v87 = vrot.slane %v86, 1
      %v88 = vadd.f32 %v86, %v87
      %s89 = vtos %v88
      %s90 = smul.f32 %s89, 0.00048828125
      %v91 = vstv %s90
      %vm92 = vcmask 0
      %93 = vst.msk [vmem:[#allocation8] sm:$0x1] %vm92, %v91
    $region25: #{tpu_custom_call.1} parent=1 // pred_fallthru
      _
    // Predicated region
    $region26: #{tpu_custom_call.1} parent=1 // pred_check
      _
    $region27: #{tpu_custom_call.1} parent=1 // pred_check_branch
      %95 = sbr.rel (0) target = $region29
    $region28: #{tpu_custom_call.1} parent=1 // pred_region
      %s97 = ssub.s32 16, 16
      %98 = vsyncadd [#allocation5], %s97
      %s100 = sshll.u32 [#allocation8], 4
      %s101 = int_to_ptr.vmem [resolvable:$true] %s100
      %103 = dma.vmem_to_hbm [thread:$0]  %s101, 16, %s2, [#allocation5]
    $region29: #{tpu_custom_call.1} parent=1 // pred_fallthru
      _
    // Predicated region
    $region30: #{tpu_custom_call.1} parent=1 // pred_check
      _
    $region31: #{tpu_custom_call.1} parent=1 // pred_check_branch
      %105 = sbr.rel (0) target = $region33
    $region32: #{tpu_custom_call.1} parent=1 // pred_region
      %106 = dma.done [#allocation5], 16
    $region33: #{tpu_custom_call.1} parent=1 // pred_fallthru
      _
    %107 = vsyncpa [#allocation4], 1
    %108 = vsyncpa [#allocation7], 1
    %109 = vsyncpa [#allocation5], 1

</llo_original>
